<compile_context>
chip_gen: v7x
topology: tpu7x:2x2x1
jax: 0.10.0
libtpu: 0.0.40
codegen_flags: <defaults>
</compile_context>

<pallas_src>
import jax
import jax.numpy as jnp
from jax.experimental import pallas as pl
from jax.experimental.pallas import tpu as pltpu


def _sigmoid_kernel(x_ref, o_ref):
    # x_ref / o_ref: (tile_rows, HW) lane-dense tiles. Pure elementwise sigmoid;
    # exp goes to the EUP slot, so this is purely HBM-bandwidth bound.
    v = x_ref[...].astype(jnp.float32)
    o_ref[...] = jax.nn.sigmoid(v).astype(o_ref.dtype)


def _round_up(a, m):
    return ((a + m - 1) // m) * m


def _sigmoid_pallas(rows2d):
    """Elementwise sigmoid over a (R, HW) lane-dense slab via Pallas."""
    R, HW = rows2d.shape
    itemsize = jnp.dtype(rows2d.dtype).itemsize

    # Cap per-tile input bytes at ~2 MiB so input+output double-buffering
    # (~4x tile bytes) fits the smallest scoped-VMEM default (v5e: 16 MiB).
    max_tile_bytes = 2 * 1024 * 1024
    rows_cap = max(8, (max_tile_bytes // max(HW * itemsize, 1)) // 8 * 8)
    tile_rows = min(512, rows_cap, _round_up(R, 8))

    # Pad rows to a multiple of the tile so every grid step is a full,
    # unmasked tile (padding is tiny: < tile_rows rows).
    R_pad = _round_up(R, tile_rows)
    if R_pad != R:
        rows2d = jnp.pad(rows2d, ((0, R_pad - R), (0, 0)))

    out = pl.pallas_call(
        _sigmoid_kernel,
        out_shape=jax.ShapeDtypeStruct((R_pad, HW), rows2d.dtype),
        grid=(R_pad // tile_rows,),
        in_specs=[pl.BlockSpec((tile_rows, HW), lambda r: (r, 0))],
        out_specs=pl.BlockSpec((tile_rows, HW), lambda r: (r, 0)),
        compiler_params=pltpu.CompilerParams(
            dimension_semantics=("parallel",)),  # v7x: split rows across 2 TCs
    )(rows2d)

    return out[:R] if R_pad != R else out


def loss_layer_forward(x, targets=None, img_dim=None, *, use_pallas=None):
    """JAX/Pallas equivalent of LossLayer.forward for targets=None.

    x: (N, C, H, W) float array (NCHW, like the PyTorch conv output).
    Returns (0, pred_boxes), pred_boxes of shape (N, H, W, 3) holding
    sigmoid(conf), sigmoid(angle), sigmoid(response).
    """
    N, C, H, W = x.shape
    assert H == W, "map must be square (map_size x map_size)"
    assert C >= 3, "need at least conf/angle/response channels"
    HW = H * W

    # Slice the 3 used channels before the call (no wasted DMA) and flatten to
    # a lane-dense (N*3, HW) slab.
    x3 = x[:, :3, :, :].reshape(N * 3, HW)

    if use_pallas is None:
        # Tiny inputs: launch + per-step overhead dominates; let XLA fuse it.
        use_pallas = x3.size >= (1 << 16)

    if use_pallas:
        out = _sigmoid_pallas(x3)
    else:
        out = jax.nn.sigmoid(x3.astype(jnp.float32)).astype(x3.dtype)

    # Glue: present output as (N, H, W, 3) to match the PyTorch pred_boxes
    # layout. Kept outside the kernel so kernel stores stay lane-dense.
    pred_boxes = out.reshape(N, 3, H, W).transpose(0, 2, 3, 1)

    if targets is None:
        return 0, pred_boxes

    # TODO(synk): training losses (MSE/BCE over obj/noobj masks) need
    # `build_targets`, which is not defined in the provided module.
    raise NotImplementedError("training path requires build_targets")


if __name__ == "__main__":
    key = jax.random.PRNGKey(0)
    N, C, H, W = 2, 4, 16, 16  # num_samples, pre_dim, map_size, map_size
    x = jax.random.normal(key, (N, C, H, W), dtype=jnp.float32)

    # Force the Pallas path so the kernel is exercised at this small test size
    # (production-sized maps take this path automatically via the threshold).
    loss, pred_boxes = loss_layer_forward(x, targets=None, img_dim=128,
                                          use_pallas=True)
    pred_boxes = jax.block_until_ready(pred_boxes)

    # Pure-JAX reference of the PyTorch semantics.
    ref = jax.nn.sigmoid(jnp.transpose(x, (0, 2, 3, 1))[..., :3])
    assert pred_boxes.shape == (N, H, W, 3)
    assert loss == 0
    assert jnp.allclose(pred_boxes, ref, atol=1e-6, rtol=1e-6)

    print("KERNEL_OK")
</pallas_src>

<mosaic_0001>
module attributes {stable_mosaic.version = 11 : i64} {
  func.func @_sigmoid_kernel(%arg0: i32, %arg1: memref<8x256xf32, #tpu.memory_space<vmem>>, %arg2: memref<8x256xf32, #tpu.memory_space<vmem>>) attributes {dimension_semantics = [#tpu.dimension_semantics<parallel>], iteration_bounds = array<i64: 1>, scalar_prefetch = 0 : i64, scratch_operands = 0 : i64, tpu.core_type = #tpu.core_type<tc>, window_params = [{transform_indices = @transform_0, window_bounds = array<i64: 8, 256>}, {transform_indices = @transform_1, window_bounds = array<i64: 8, 256>}]} {
    %c0 = arith.constant 0 : index
    %c0_0 = arith.constant 0 : index
    %0 = vector.load %arg1[%c0, %c0_0] : memref<8x256xf32, #tpu.memory_space<vmem>>, vector<8x256xf32>
    %1 = arith.negf %0 : vector<8x256xf32>
    %2 = math.exp %1 : vector<8x256xf32>
    %cst = arith.constant 1.000000e+00 : f32
    %3 = vector.broadcast %cst : f32 to vector<8x256xf32>
    %4 = arith.addf %3, %2 : vector<8x256xf32>
    %5 = arith.divf %3, %4 : vector<8x256xf32>
    %c0_1 = arith.constant 0 : index
    %c0_2 = arith.constant 0 : index
    %6 = vector.load %arg2[%c0_1, %c0_2] : memref<8x256xf32, #tpu.memory_space<vmem>>, vector<8x256xf32>
    tpu.vector_store %arg2[%c0_1, %c0_2], %5 {strides = array<i32>} : memref<8x256xf32, #tpu.memory_space<vmem>>, vector<8x256xf32>,
    return
  }
  func.func @transform_0(%arg0: i32) -> (i32, i32) {
    %c0_i32 = arith.constant 0 : i32
    %c0_i32_0 = arith.constant 0 : i32
    return %arg0, %c0_i32 : i32, i32
  }
  func.func @transform_1(%arg0: i32) -> (i32, i32) {
    %c0_i32 = arith.constant 0 : i32
    %c0_i32_0 = arith.constant 0 : i32
    return %arg0, %c0_i32 : i32, i32
  }
}

</mosaic_0001>

<llo_original>
// kernel: tpu_custom_call.1
$region0: #{tpu_custom_call.1}
  #allocation0 [shape = 'u32[]', space=smem, size = 0x4, offset = 0x4, fixed_abs, tag = 'smem constant byte address 0x4 - core index']
  #allocation1 [shape = 'u32[144,128]{1,0:T(1,128)}', space=vmem, size = 0x12000, scoped, tag = 'internal scratch']
  %s0 = inlined_call_operand.hbm [shape: f32[8,256], index: 0, kind: input, shape index: {}]
  %s1 = inlined_call_operand.hbm [shape: f32[8,256], index: 1, kind: output, shape index: {}]
  %s2 = sld [smem:[#allocation0]]
  $region18: #{tpu_custom_call.1} parent=0
    _
  %s4 = ssub.s32 1, %s2
  %s5 = scalar_select 0, %s4, %s2
  $region1: #{tpu_custom_call.1} parent=0
    #allocation2 [shape = 'u8[8192]{0}', space=vmem, size = 0x2000, scoped, tag = 'input window, operand 0, single buffered']
    #allocation3 [shape = 's32[1]{0}', space=sflag, size = 0x4, scoped, tag = 'scoped memory for tpu_custom_call.1']
    #allocation4 [shape = 's32[1]{0}', space=sflag, size = 0x4, scoped, tag = 'scoped memory for tpu_custom_call.1']
    #allocation5 [shape = 'u8[8192]{0}', space=vmem, size = 0x2000, scoped, tag = 'output window, operand 0, single buffered']
    %6 = vsyncpa [#allocation3], 0
    %7 = vsyncpa [#allocation4], 0
    // Predicated region
    $region2: #{tpu_custom_call.1} parent=1 // pred_check
      _
    $region3: #{tpu_custom_call.1} parent=1 // pred_check_branch
      %9 = sbr.rel (0) target = $region5
    $region4: #{tpu_custom_call.1} parent=1 // pred_region
      %s11 = ssub.s32 256, 256
      %12 = vsyncadd [#allocation3], %s11
      %s14 = sshll.u32 [#allocation2], 4
      %s15 = int_to_ptr.vmem [resolvable:$true] %s14
      %17 = dma.hbm_to_vmem [thread:$0]  %s0, 256, %s15, [#allocation3]
    $region5: #{tpu_custom_call.1} parent=1 // pred_fallthru
      _
    // Predicated region
    $region6: #{tpu_custom_call.1} parent=1 // pred_check
      _
    $region7: #{tpu_custom_call.1} parent=1 // pred_check_branch
      %19 = sbr.rel (0) target = $region9
    $region8: #{tpu_custom_call.1} parent=1 // pred_region
      %20 = dma.done [#allocation3], 256
    $region9: #{tpu_custom_call.1} parent=1 // pred_fallthru
      _
    %v21 = vld [vmem:[#allocation2] sm:$0xff]
    %v22 = vld [vmem:[#allocation2 + $0x8] sm:$0xff]
    %v23 = vxor.u32 %v21, 2147483648
    %v24 = vxor.u32 %v22, 2147483648
    %v25 = vmul.f32 %v23, 1.442695
    %v26 = vpow.pop %v25
    %v27 = vmul.f32 %v24, 1.442695
    %v28 = vpow.pop %v27
    %v29 = vadd.f32 %v26, 1.0
    %v30 = vadd.f32 %v28, 1.0
    %v31 = vrcp.pop %v29
    %v32 = vmul.f32 1.0, %v31
    %v33 = vrcp.pop %v30
    %v34 = vmul.f32 1.0, %v33
    %35 = vst [vmem:[#allocation5] sm:$0xff] %v32
    %36 = vst [vmem:[#allocation5 + $0x8] sm:$0xff] %v34
    // Predicated region
    $region10: #{tpu_custom_call.1} parent=1 // pred_check
      _
    $region11: #{tpu_custom_call.1} parent=1 // pred_check_branch
      %38 = sbr.rel (0) target = $region13
    $region12: #{tpu_custom_call.1} parent=1 // pred_region
      %s40 = ssub.s32 256, 256
      %41 = vsyncadd [#allocation4], %s40
      %s43 = sshll.u32 [#allocation5], 4
      %s44 = int_to_ptr.vmem [resolvable:$true] %s43
      %46 = dma.vmem_to_hbm [thread:$0]  %s44, 256, %s1, [#allocation4]
    $region13: #{tpu_custom_call.1} parent=1 // pred_fallthru
      _
    // Predicated region
    $region14: #{tpu_custom_call.1} parent=1 // pred_check
      _
    $region15: #{tpu_custom_call.1} parent=1 // pred_check_branch
      %48 = sbr.rel (0) target = $region17
    $region16: #{tpu_custom_call.1} parent=1 // pred_region
      %49 = dma.done [#allocation4], 256
    $region17: #{tpu_custom_call.1} parent=1 // pred_fallthru
      _
    %50 = vsyncpa [#allocation3], 1
    %51 = vsyncpa [#allocation4], 1

</llo_original>
